<compile_context>
chip_gen: v7x
topology: tpu7x:2x2x1
jax: 0.10.0
libtpu: 0.0.40
codegen_flags: <defaults>
</compile_context>

<pallas_src>
import functools

import jax
import jax.numpy as jnp
from jax.experimental import pallas as pl
from jax.experimental.pallas import tpu as pltpu


_MIB = 1024 * 1024
# Scoped-VMEM limit that is safe on every generation (v5e/v6e default scoped
# limits are 16/32 MiB of 128 MiB physical; v7x has only 64 MiB physical).
_VMEM_LIMIT_BYTES = 32 * _MIB
# Gate for the fused (single-pass) kernel: double-buffered in/out slabs plus
# in-kernel f32 temporaries must stay well inside the scoped limit above.
_FUSED_BUDGET_BYTES = 24 * _MIB
# Per-block byte target for the streaming (two-pass) fallback: big enough to
# amortize the ~0.35 us per-grid-step overhead, small enough that the
# double-buffered footprint stays under the scoped limit.
_STREAM_BLOCK_BYTES = 4 * _MIB


# ---------------------------------------------------------------------------
# Fused single-pass kernel: pool + conv1x1(+BN folded) + sigmoid + multiply.
# ---------------------------------------------------------------------------
def _fused_arm_kernel(x_ref, w_ref, shift_ref, o_ref, *, inv_hw):
    # x_ref: (1, C, HW) slab resident in VMEM.
    # w_ref: (C, C) f32 conv weight with the BN scale folded in.
    # shift_ref: (C, 1) f32 folded BN shift.
    x = x_ref[0]                                                       # (C, HW)

    # Global average pool: lane (XLU) reduce over HW, accumulate in f32.
    pooled = jnp.sum(x.astype(jnp.float32), axis=-1, keepdims=True) * inv_hw  # (C,1)

    # Tiny folded conv1x1 + BN on the pooled vector (one small MXU dot).
    y = jnp.dot(w_ref[...], pooled, preferred_element_type=jnp.float32)       # (C,1)
    z = y + shift_ref[...]
    att = 1.0 / (1.0 + jnp.exp(-z))                                    # sigmoid, f32

    # Gate is cast to the I/O dtype before the broadcast multiply (for bf16 x
    # this rounds the gate to bf16 — deliberate precision choice; keeps the
    # big product in the I/O dtype so no f32 copy of the slab is made).
    o_ref[0] = x * att.astype(x.dtype)


# ---------------------------------------------------------------------------
# Two-pass streaming fallback (slab too large to keep VMEM-resident).
# ---------------------------------------------------------------------------
def _pool_kernel(x_ref, o_ref):
    # x_ref: (1, C, thw) block; o_ref: (1, C, 1) f32 accumulator (resident
    # across the HW "arbitrary" grid axis).
    @pl.when(pl.program_id(1) == 0)
    def _():
        o_ref[...] = jnp.zeros_like(o_ref)

    o_ref[...] += jnp.sum(x_ref[...].astype(jnp.float32), axis=-1, keepdims=True)


def _mul_kernel(x_ref, att_ref, o_ref):
    # x_ref: (1, C, thw), att_ref: (1, C, 1).  Gate cast to the I/O dtype so
    # the big product stays in that dtype (no full-tile upcast).
    att = att_ref[...].astype(o_ref.dtype)
    o_ref[...] = x_ref[...] * att


def _pick_hw_tile(hw, c, itemsize, target_bytes=_STREAM_BLOCK_BYTES, min_tiles=1):
    """Largest multiple-of-128 divisor of `hw` whose (C, thw) block is at most
    ~target_bytes, optionally leaving at least `min_tiles` grid points (so a
    'parallel' HW axis can feed both v7x TensorCores when N == 1).  Falls back
    to the full HW extent (always legal: block equals the array dim)."""
    if hw % 128 != 0:
        # TODO(synk): pad HW to a multiple of 128 in the wrapper to avoid
        # lane-masked partial stores on such shapes (perf only, not correctness).
        return hw
    max_elems = max(128, (target_bytes // max(1, c * itemsize)) // 128 * 128)
    if min_tiles > 1:
        max_elems = min(max_elems, max(128, (hw // min_tiles) // 128 * 128))
    limit = min(max_elems, hw)
    best, t = 128, 128
    while t <= limit:
        if hw % t == 0:
            best = t
        t += 128
    return best


def arm_forward(x_nchw, conv_w, bn_gamma, bn_beta, bn_mean, bn_var,
                eps=1e-5, force_two_pass=False):
    """ARM forward.  x_nchw: (N, C, H, W); conv_w: (C_out, C_in) from the
    (C, C, 1, 1) PyTorch weight.  Inference-mode BatchNorm (running stats)."""
    N, C, H, W = x_nchw.shape
    HW = H * W
    itemsize = jnp.dtype(x_nchw.dtype).itemsize

    # Free relayout: NCHW -> (N, C, HW)  (no transpose, no HBM traffic).
    x = x_nchw.reshape(N, C, HW)

    # Fold BatchNorm (running statistics) into the 1x1 conv.
    scale = bn_gamma.astype(jnp.float32) / jnp.sqrt(bn_var.astype(jnp.float32) + eps)
    w_scaled = conv_w.astype(jnp.float32) * scale[:, None]      # (C, C)
    shift = bn_beta.astype(jnp.float32) - bn_mean.astype(jnp.float32) * scale  # (C,)

    slab_bytes = C * HW * itemsize
    # 2x double-buffered input + 2x double-buffered output + an f32 temp for
    # the in-kernel pooled reduce + the tiny weight/shift blocks.
    fused_bytes = 4 * slab_bytes + C * HW * 4 + 2 * (C * C + C) * 4
    use_fused = (not force_two_pass) and fused_bytes <= _FUSED_BUDGET_BYTES

    if use_fused:
        # ---- fused single pass: x read once, written once -------------------
        out = pl.pallas_call(
            functools.partial(_fused_arm_kernel, inv_hw=1.0 / HW),
            out_shape=jax.ShapeDtypeStruct((N, C, HW), x_nchw.dtype),
            grid_spec=pltpu.PrefetchScalarGridSpec(
                num_scalar_prefetch=0,
                grid=(N,),
                in_specs=[
                    pl.BlockSpec((1, C, HW), lambda n: (n, 0, 0)),   # x slab
                    pl.BlockSpec((C, C), lambda n: (0, 0)),          # folded conv+BN
                    pl.BlockSpec((C, 1), lambda n: (0, 0)),          # folded BN shift
                ],
                out_specs=pl.BlockSpec((1, C, HW), lambda n: (n, 0, 0)),
            ),
            compiler_params=pltpu.CompilerParams(
                dimension_semantics=("parallel",),
                vmem_limit_bytes=_VMEM_LIMIT_BYTES),
            cost_estimate=pl.CostEstimate(
                flops=2 * N * C * HW + 2 * N * C * C,
                transcendentals=N * C,
                bytes_accessed=2 * N * slab_bytes),
        )(x, w_scaled, shift.reshape(C, 1))
        return out.reshape(N, C, H, W)

    # ---- fallback: two streaming passes with byte-aware HW tiles ------------
    # min_tiles=2 when N == 1 keeps >= 2 grid points on a 'parallel' axis so
    # both v7x TensorCores stay busy.
    thw = _pick_hw_tile(HW, C, itemsize, min_tiles=2 if N == 1 else 1)
    n_hw = HW // thw

    # pass 1: global average pool (sum, tiled over HW).  The pooled output is
    # tiny, so we keep the proven (N, C, 1) accumulator layout.
    pooled = pl.pallas_call(
        _pool_kernel,
        out_shape=jax.ShapeDtypeStruct((N, C, 1), jnp.float32),
        grid_spec=pltpu.PrefetchScalarGridSpec(
            num_scalar_prefetch=0,
            grid=(N, n_hw),
            in_specs=[pl.BlockSpec((1, C, thw), lambda n, h: (n, 0, h))],
            out_specs=pl.BlockSpec((1, C, 1), lambda n, h: (n, 0, 0)),
        ),
        compiler_params=pltpu.CompilerParams(
            dimension_semantics=("parallel", "arbitrary"),
            vmem_limit_bytes=_VMEM_LIMIT_BYTES),
    )(x)

    pooled = pooled[:, :, 0] * (1.0 / HW)                        # (N, C) mean, f32

    # tiny conv1x1 + BN + sigmoid on the pooled vector (plain JAX glue).
    att = jax.nn.sigmoid(pooled @ w_scaled.T + shift[None, :])   # (N, C) f32
    att = att.reshape(N, C, 1)

    # pass 2: per-channel re-weighting, lane-dense stores, both axes parallel.
    out = pl.pallas_call(
        _mul_kernel,
        out_shape=jax.ShapeDtypeStruct((N, C, HW), x_nchw.dtype),
        grid_spec=pltpu.PrefetchScalarGridSpec(
            num_scalar_prefetch=0,
            grid=(N, n_hw),
            in_specs=[
                pl.BlockSpec((1, C, thw), lambda n, h: (n, 0, h)),   # x
                pl.BlockSpec((1, C, 1), lambda n, h: (n, 0, 0)),     # gate
            ],
            out_specs=pl.BlockSpec((1, C, thw), lambda n, h: (n, 0, h)),
        ),
        compiler_params=pltpu.CompilerParams(
            dimension_semantics=("parallel", "parallel"),
            vmem_limit_bytes=_VMEM_LIMIT_BYTES),
        cost_estimate=pl.CostEstimate(
            flops=N * C * HW,
            transcendentals=0,
            bytes_accessed=2 * N * slab_bytes),
    )(x, att)

    return out.reshape(N, C, H, W)


def arm_reference(x, conv_w, gamma, beta, mean, var, eps=1e-5):
    """Pure-JAX reference (NCHW), inference-mode BN."""
    pooled = jnp.mean(x, axis=(2, 3), keepdims=True)                 # (N,C,1,1)
    y = jnp.einsum('oc,ncij->noij', conv_w, pooled)                  # 1x1 conv
    y = (y - mean[None, :, None, None]) / jnp.sqrt(var[None, :, None, None] + eps)
    y = y * gamma[None, :, None, None] + beta[None, :, None, None]
    att = jax.nn.sigmoid(y)
    return att * x


if __name__ == "__main__":
    N, C, H, W = 2, 4, 16, 16

    key = jax.random.PRNGKey(0)
    k_x, k_w, k_g, k_b, k_m, k_v = jax.random.split(key, 6)

    x = jax.random.normal(k_x, (N, C, H, W), dtype=jnp.float32)
    # Conv2d(in_channs, in_channs, 1, 1, 0, bias=False) -> weight (C, C, 1, 1)
    conv_w = jax.random.normal(k_w, (C, C), dtype=jnp.float32) * 0.5
    # BatchNorm2d(in_channs) parameters + running stats (deterministic)
    bn_gamma = 1.0 + 0.1 * jax.random.normal(k_g, (C,), dtype=jnp.float32)
    bn_beta = 0.1 * jax.random.normal(k_b, (C,), dtype=jnp.float32)
    bn_mean = 0.1 * jax.random.normal(k_m, (C,), dtype=jnp.float32)
    bn_var = jnp.abs(jax.random.normal(k_v, (C,), dtype=jnp.float32)) + 0.5

    ref = arm_reference(x, conv_w, bn_gamma, bn_beta, bn_mean, bn_var)

    # Primary fused single-pass path.
    out = jax.block_until_ready(
        arm_forward(x, conv_w, bn_gamma, bn_beta, bn_mean, bn_var))
    assert out.shape == (N, C, H, W)
    assert jnp.allclose(out, ref, rtol=1e-3, atol=1e-5), "fused path mismatch"

    # Streaming two-pass fallback (used when the per-batch slab exceeds the
    # VMEM budget); exercised here explicitly to keep it validated.
    out2 = jax.block_until_ready(
        arm_forward(x, conv_w, bn_gamma, bn_beta, bn_mean, bn_var,
                    force_two_pass=True))
    assert jnp.allclose(out2, ref, rtol=1e-3, atol=1e-5), "two-pass path mismatch"

    print("KERNEL_OK")
</pallas_src>

<mosaic_0001>
module attributes {stable_mosaic.version = 11 : i64} {
  func.func @_fused_arm_kernel(%arg0: i32, %arg1: memref<1x4x256xf32, #tpu.memory_space<vmem>>, %arg2: memref<4x4xf32, #tpu.memory_space<vmem>>, %arg3: memref<4x1xf32, #tpu.memory_space<vmem>>, %arg4: memref<1x4x256xf32, #tpu.memory_space<vmem>>) attributes {dimension_semantics = [#tpu.dimension_semantics<parallel>], iteration_bounds = array<i64: 2>, scalar_prefetch = 0 : i64, scratch_operands = 0 : i64, tpu.core_type = #tpu.core_type<tc>, window_params = [{transform_indices = @transform_0, window_bounds = array<i64: 1, 4, 256>}, {pipeline_mode = #tpu.pipeline_mode<synchronous>, transform_indices = @transform_1, window_bounds = array<i64: 4, 4>}, {pipeline_mode = #tpu.pipeline_mode<synchronous>, transform_indices = @transform_2, window_bounds = array<i64: 4, 1>}, {transform_indices = @transform_3, window_bounds = array<i64: 1, 4, 256>}]} {
    %c0 = arith.constant 0 : index
    %c0_0 = arith.constant 0 : index
    %c0_1 = arith.constant 0 : index
    %0 = vector.load %arg1[%c0, %c0_0, %c0_1] : memref<1x4x256xf32, #tpu.memory_space<vmem>>, vector<1x4x256xf32>
    %1 = vector.shape_cast %0 : vector<1x4x256xf32> to vector<4x256xf32>
    %cst = arith.constant dense<0.000000e+00> : vector<4xf32>
    %2 = vector.multi_reduction <add>, %1, %cst [1] : vector<4x256xf32> to vector<4xf32>
    %3 = vector.shape_cast %2 : vector<4xf32> to vector<4x1xf32>
    %cst_2 = arith.constant 3.906250e-03 : f32
    %4 = vector.broadcast %cst_2 : f32 to vector<4x1xf32>
    %5 = arith.mulf %3, %4 : vector<4x1xf32>
    %c0_3 = arith.constant 0 : index
    %c0_4 = arith.constant 0 : index
    %6 = vector.load %arg2[%c0_3, %c0_4] : memref<4x4xf32, #tpu.memory_space<vmem>>, vector<4x4xf32>
    %cst_5 = arith.constant dense<0.000000e+00> : vector<4x1xf32>
    %7 = tpu.matmul %6, %5, %cst_5 {dimension_numbers = #tpu.dot_dimension_numbers<[1], [0], [0], [1], [0, 0, 1, 1], [], []>} : vector<4x4xf32>, vector<4x1xf32>, vector<4x1xf32> -> vector<4x1xf32>
    %c0_6 = arith.constant 0 : index
    %c0_7 = arith.constant 0 : index
    %8 = vector.load %arg3[%c0_6, %c0_7] : memref<4x1xf32, #tpu.memory_space<vmem>>, vector<4x1xf32>
    %9 = arith.addf %7, %8 : vector<4x1xf32>
    %cst_8 = arith.constant 0.000000e+00 : f32
    %10 = vector.broadcast %cst_8 : f32 to vector<4x1xf32>
    %11 = arith.subf %10, %9 : vector<4x1xf32>
    %12 = math.exp %11 : vector<4x1xf32>
    %cst_9 = arith.constant 1.000000e+00 : f32
    %13 = vector.broadcast %cst_9 : f32 to vector<4x1xf32>
    %14 = arith.addf %13, %12 : vector<4x1xf32>
    %cst_10 = arith.constant 1.000000e+00 : f32
    %15 = vector.broadcast %cst_10 : f32 to vector<4x1xf32>
    %16 = arith.divf %15, %14 : vector<4x1xf32>
    %17 = vector.broadcast %16 : vector<4x1xf32> to vector<4x256xf32>
    %18 = arith.mulf %1, %17 : vector<4x256xf32>
    %c0_11 = arith.constant 0 : index
    %c0_12 = arith.constant 0 : index
    %c0_13 = arith.constant 0 : index
    %19 = vector.load %arg4[%c0_11, %c0_12, %c0_13] : memref<1x4x256xf32, #tpu.memory_space<vmem>>, vector<1x4x256xf32>
    %20 = vector.shape_cast %19 : vector<1x4x256xf32> to vector<4x256xf32>
    %21 = vector.shape_cast %18 : vector<4x256xf32> to vector<1x4x256xf32>
    tpu.vector_store %arg4[%c0_11, %c0_12, %c0_13], %21 {strides = array<i32>} : memref<1x4x256xf32, #tpu.memory_space<vmem>>, vector<1x4x256xf32>,
    return
  }
  func.func @transform_0(%arg0: i32) -> (i32, i32, i32) {
    %c0_i32 = arith.constant 0 : i32
    %c0_i32_0 = arith.constant 0 : i32
    %c0_i32_1 = arith.constant 0 : i32
    return %arg0, %c0_i32, %c0_i32_0 : i32, i32, i32
  }
  func.func @transform_1(%arg0: i32) -> (i32, i32) {
    %c0_i32 = arith.constant 0 : i32
    %c0_i32_0 = arith.constant 0 : i32
    %c0_i32_1 = arith.constant 0 : i32
    return %c0_i32, %c0_i32_0 : i32, i32
  }
  func.func @transform_2(%arg0: i32) -> (i32, i32) {
    %c0_i32 = arith.constant 0 : i32
    %c0_i32_0 = arith.constant 0 : i32
    %c0_i32_1 = arith.constant 0 : i32
    return %c0_i32, %c0_i32_0 : i32, i32
  }
  func.func @transform_3(%arg0: i32) -> (i32, i32, i32) {
    %c0_i32 = arith.constant 0 : i32
    %c0_i32_0 = arith.constant 0 : i32
    %c0_i32_1 = arith.constant 0 : i32
    return %arg0, %c0_i32, %c0_i32_0 : i32, i32, i32
  }
}

</mosaic_0001>

<llo_original>
// kernel: tpu_custom_call.1
$region0: #{tpu_custom_call.1}
  #allocation0 [shape = 'u32[]', space=smem, size = 0x4, offset = 0x4, fixed_abs, tag = 'smem constant byte address 0x4 - core index']
  #allocation1 [shape = 'u32[144,128]{1,0:T(1,128)}', space=vmem, size = 0x12000, scoped, tag = 'internal scratch']
  %s0 = inlined_call_operand.hbm [shape: f32[2,4,256], index: 0, kind: input, shape index: {}]
  %s1 = inlined_call_operand.vmem [shape: f32[4,4], index: 1, kind: input, shape index: {}]
  %s2 = inlined_call_operand.vmem [shape: f32[4,1], index: 2, kind: input, shape index: {}]
  %s3 = inlined_call_operand.hbm [shape: f32[2,4,256], index: 3, kind: output, shape index: {}]
  %s4 = sld [smem:[#allocation0]]
  $region49: #{tpu_custom_call.1} parent=0
    _
  %s6 = ssub.s32 1, %s4
  %s7 = scalar_select 0, %s6, %s4
  $region1: #{tpu_custom_call.1} parent=0
    #allocation2 [shape = 'u8[8192]{0}', space=vmem, size = 0x2000, scoped, tag = 'input window, operand 0']
    #allocation3 [shape = 's32[2]{0}', space=sflag, size = 0x8, scoped, tag = 'scoped memory for tpu_custom_call.1']
    #allocation4 [shape = 's32[2]{0}', space=sflag, size = 0x8, scoped, tag = 'scoped memory for tpu_custom_call.1']
    #allocation5 [shape = 'u8[8192]{0}', space=vmem, size = 0x2000, scoped, tag = 'output window, operand 0']
    %8 = vsyncpa [#allocation3], 0
    %s9 = scalar_lea.sflag [#allocation3], 1
    %10 = vsyncpa %s9, 0
    %11 = vsyncpa [#allocation4], 0
    %s12 = scalar_lea.sflag [#allocation4], 1
    %13 = vsyncpa %s12, 0
    loop: start=0, step=1, limit=4
    $region2: #{tpu_custom_call.1} parent=1 // loop_pre_header
      _
    $region3: #{tpu_custom_call.1} parent=1 // loop_header
      %s15 = sphi 0, %s19
      %p16 = scmp.ge.s32.totalorder %s15, 4
      %s25 = sphi 0, %s27
      %s28 = sphi 0, %s25
      %s29 = sphi 0, %s28
      %s45 = sphi 0, %s29
      %s49 = sphi 0, %s49
      %s51 = sphi 0, %s49
      %s52 = sphi 0, %s51
      %s66 = sphi 0, %s52
      %s70 = sphi 0, %s70
      %s72 = sphi 0, %s70
      %s73 = sphi 0, %s72
      %s87 = sphi 0, %s73
      %s93 = sphi 0, %s95
      %s96 = sphi 0, %s93
      %s97 = sphi 0, %s96
      %s113 = sphi 0, %s97
    $region4: #{tpu_custom_call.1} parent=1 // loop_header_branch
      %18 = sbr.rel (%p16) target = $region8
    $region5: #{tpu_custom_call.1} parent=1 // loop_body
      %s20 = ssub.s32 %s15, 1
      %s21 = ssub.s32 %s15, 2
      %s22 = sadd.s32 %s15, 1
      %s23 = ssub.s32 %s15, %s22
      %p24 = scmp.eq.s32.totalorder %s23, 0
      %s26 = sadd.s32 %s25, 1
      %s27 = scalar_select %p24, %s25, %s26
      %p30 = pneg %p24
      %p31 = scmp.eq.s32.totalorder %s15, 1
      %p32 = por %p30, %p31
      %p33 = scmp.ne.s32.totalorder %s25, %s28
      %p34 = scmp.eq.s32.totalorder %s15, 0
      %p35 = por %p33, %p34
      %p36 = scmp.ne.s32.totalorder %s25, %s28
      %p37 = scmp.eq.s32.totalorder %s20, 1
      %p38 = por %p36, %p37
      %p39 = scmp.ne.s32.totalorder %s28, %s29
      %p40 = scmp.eq.s32.totalorder %s20, 0
      %p41 = por %p39, %p40
      %p42 = scmp.ne.s32.totalorder %s28, %s29
      %p43 = scmp.eq.s32.totalorder %s21, 1
      %p44 = por %p42, %p43
      %p46 = scmp.ne.s32.totalorder %s29, %s45
      %p47 = scmp.eq.s32.totalorder %s21, 0
      %p48 = por %p46, %p47
      %s50 = sadd.s32 %s49, 1
      %p53 = scmp.eq.s32.totalorder %s15, 1
      %p54 = scmp.ne.s32.totalorder %s49, %s51
      %p55 = scmp.eq.s32.totalorder %s15, 0
      %p56 = por %p54, %p55
      %p57 = scmp.ne.s32.totalorder %s49, %s51
      %p58 = scmp.eq.s32.totalorder %s20, 1
      %p59 = por %p57, %p58
      %p60 = scmp.ne.s32.totalorder %s51, %s52
      %p61 = scmp.eq.s32.totalorder %s20, 0
      %p62 = por %p60, %p61
      %p63 = scmp.ne.s32.totalorder %s51, %s52
      %p64 = scmp.eq.s32.totalorder %s21, 1
      %p65 = por %p63, %p64
      %p67 = scmp.ne.s32.totalorder %s52, %s66
      %p68 = scmp.eq.s32.totalorder %s21, 0
      %p69 = por %p67, %p68
      %s71 = sadd.s32 %s70, 1
      %p74 = scmp.eq.s32.totalorder %s15, 1
      %p75 = scmp.ne.s32.totalorder %s70, %s72
      %p76 = scmp.eq.s32.totalorder %s15, 0
      %p77 = por %p75, %p76
      %p78 = scmp.ne.s32.totalorder %s70, %s72
      %p79 = scmp.eq.s32.totalorder %s20, 1
      %p80 = por %p78, %p79
      %p81 = scmp.ne.s32.totalorder %s72, %s73
      %p82 = scmp.eq.s32.totalorder %s20, 0
      %p83 = por %p81, %p82
      %p84 = scmp.ne.s32.totalorder %s72, %s73
      %p85 = scmp.eq.s32.totalorder %s21, 1
      %p86 = por %p84, %p85
      %p88 = scmp.ne.s32.totalorder %s73, %s87
      %p89 = scmp.eq.s32.totalorder %s21, 0
      %p90 = por %p88, %p89
      %s91 = ssub.s32 %s15, %s22
      %p92 = scmp.eq.s32.totalorder %s91, 0
      %s94 = sadd.s32 %s93, 1
      %s95 = scalar_select %p92, %s93, %s94
      %p98 = pneg %p92
      %p99 = scmp.eq.s32.totalorder %s15, 1
      %p100 = por %p98, %p99
      %p101 = scmp.ne.s32.totalorder %s93, %s96
      %p102 = scmp.eq.s32.totalorder %s15, 0
      %p103 = por %p101, %p102
      %p104 = scmp.ne.s32.totalorder %s93, %s96
      %p105 = scmp.eq.s32.totalorder %s20, 1
      %p106 = por %p104, %p105
      %p107 = scmp.ne.s32.totalorder %s96, %s97
      %p108 = scmp.eq.s32.totalorder %s20, 0
      %p109 = por %p107, %p108
      %p110 = scmp.ne.s32.totalorder %s96, %s97
      %p111 = scmp.eq.s32.totalorder %s21, 1
      %p112 = por %p110, %p111
      %p114 = scmp.ne.s32.totalorder %s97, %s113
      %p115 = scmp.eq.s32.totalorder %s21, 0
      %p116 = por %p114, %p115
      %p117 = scmp.le.s32.totalorder 1, %s15
      %p118 = scmp.lt.s32.totalorder %s15, 3
      %p119 = pnand %p117, %p118
      %p120 = pneg %p119
      // Predicated region
      $region9: #{tpu_custom_call.1} parent=5 // pred_check
        _
      $region10: #{tpu_custom_call.1} parent=5 // pred_check_branch
        %122 = sbr.rel (%p119) target = $region12
      $region11: #{tpu_custom_call.1} parent=5 // pred_region
        %s123 = ssub.s32 %s15, 1
        // Predicated region
        $region13: #{tpu_custom_call.1} parent=11 // pred_check
          %p124 = pneg %p62
        $region14: #{tpu_custom_call.1} parent=11 // pred_check_branch
          %126 = sbr.rel (%p124) target = $region16
        $region15: #{tpu_custom_call.1} parent=11 // pred_region
          _
        $region16: #{tpu_custom_call.1} parent=11 // pred_fallthru
          _
        // Predicated region
        $region17: #{tpu_custom_call.1} parent=11 // pred_check
          %p127 = pneg %p83
        $region18: #{tpu_custom_call.1} parent=11 // pred_check_branch
          %129 = sbr.rel (%p127) target = $region20
        $region19: #{tpu_custom_call.1} parent=11 // pred_region
          _
        $region20: #{tpu_custom_call.1} parent=11 // pred_fallthru
          _
      $region12: #{tpu_custom_call.1} parent=5 // pred_fallthru
        _
      %p130 = scmp.lt.s32.totalorder %s15, 2
      // Predicated region
      $region21: #{tpu_custom_call.1} parent=5 // pred_check
        %p131 = pneg %p130
      $region22: #{tpu_custom_call.1} parent=5 // pred_check_branch
        %133 = sbr.rel (%p131) target = $region24
      $region23: #{tpu_custom_call.1} parent=5 // pred_region
        // Predicated region
        $region25: #{tpu_custom_call.1} parent=23 // pred_check
          %p134 = pneg %p35
        $region26: #{tpu_custom_call.1} parent=23 // pred_check_branch
          %136 = sbr.rel (%p134) target = $region28
        $region27: #{tpu_custom_call.1} parent=23 // pred_region
          %s137 = sand.u32 %s25, 1
          %s138 = scalar_lea.sflag [#allocation3], %s137
          %s139 = sand.u32 %s25, 1
          %s140 = smul.addr %s139, 8
          %s141 = scalar_lea.vmem [#allocation2], %s140
          %s143 = ssub.s32 128, 128
          %144 = vsyncadd %s138, %s143
          %s145 = smul.addr %s15, 2
          %s146 = smul.addr %s145, 64
          %s147 = scalar_lea.hbm %s0, %s146
          %s149 = sshll.u32 %s141, 4
          %s150 = int_to_ptr.vmem [resolvable:$true] %s149
          %152 = dma.hbm_to_vmem [thread:$0]  %s147, 128, %s150, %s138
        $region28: #{tpu_custom_call.1} parent=23 // pred_fallthru
          _
      $region24: #{tpu_custom_call.1} parent=5 // pred_fallthru
        _
      %p153 = scmp.le.s32.totalorder 1, %s15
      %p154 = scmp.lt.s32.totalorder %s15, 3
      %p155 = pnand %p153, %p154
      %p156 = pneg %p155
      // Predicated region
      $region29: #{tpu_custom_call.1} parent=5 // pred_check
        _
      $region30: #{tpu_custom_call.1} parent=5 // pred_check_branch
        %158 = sbr.rel (%p155) target = $region32
      $region31: #{tpu_custom_call.1} parent=5 // pred_region
        %s159 = ssub.s32 %s15, 1
        %s160 = sand.u32 %s28, 1
        %s161 = scalar_lea.sflag [#allocation3], %s160
        %s162 = sand.u32 %s28, 1
        %s163 = smul.addr %s162, 8
        %s164 = scalar_lea.vmem [#allocation2], %s163
        // Predicated region
        $region33: #{tpu_custom_call.1} parent=31 // pred_check
          %p165 = pneg %p41
        $region34: #{tpu_custom_call.1} parent=31 // pred_check_branch
          %167 = sbr.rel (%p165) target = $region36
        $region35: #{tpu_custom_call.1} parent=31 // pred_region
          %168 = dma.done %s161, 128
        $region36: #{tpu_custom_call.1} parent=31 // pred_fallthru
          _
        %s169 = sand.u32 %s28, 1
        %s170 = scalar_lea.sflag [#allocation3], %s169
        %s171 = sand.u32 %s28, 1
        %s172 = smul.addr %s171, 8
        %s173 = scalar_lea.vmem [#allocation2], %s172
        %p174 = pneg %p41
        %p175 = pneg %p38
        %p176 = pneg %p62
        %p177 = pneg %p59
        %p178 = pneg %p83
        %p179 = pneg %p80
        %p180 = pneg %p109
        %p181 = pneg %p106
        %s182 = sand.u32 %s96, 1
        %s183 = scalar_lea.sflag [#allocation4], %s182
        %s184 = sand.u32 %s96, 1
        %s185 = smul.addr %s184, 8
        %s186 = scalar_lea.vmem [#allocation5], %s185
        %v187 = vld [vmem:[%s164] sm:$0xff]
        %v189 = vcombine.high %v187, %v187
        %vm191 = vcmask 1043456
        %v192 = vsel %vm191, %v187, 0.0
        %v193 = vsel %vm191, %v189, 0.0
        %v194 = vadd.f32 %v192, %v193
        %195 = vadd.xlane.f32.xlu0 %v194
        %v196 = vpop.xlane.xlu0 %195
        %v197 = vmul.f32 %v196, 0.00390625
        %v198 = vld [vmem:[%s1] sm:$0xf]
        %v199 = vld [vmem:[%s2] sm:$0xf]
        %vm200 = vcmask 31744
        %v202 = vsel %vm200, %v198, 0
        %v205 = vsel %vm191, %v197, 0
        %207 = vmatprep.subr.mxu0 0.0
        %208 = vmatpush1.msra.mxu0 %v205
        %209 = vmatprep.subr.mxu0 0.0
        %210 = vmatpush1.msra.mxu0 0.0
        %211 = vmatprep.subr.mxu0 0.0
        %212 = vmatpush1.msra.mxu0 0.0
        %213 = vmatprep.subr.mxu0 0.0
        %214 = vmatpush1.msra.mxu0 0.0
        %215 = vmatprep.subr.mxu0 0.0
        %216 = vmatpush1.msra.mxu0 0.0
        %217 = vmatprep.subr.mxu0 0.0
        %218 = vmatpush1.msra.mxu0 0.0
        %219 = vmatprep.subr.mxu0 0.0
        %220 = vmatpush1.msra.mxu0 0.0
        %221 = vmatprep.subr.mxu0 0.0
        %222 = vmatpush1.msra.mxu0 0.0
        %223 = vmatprep.subr.mxu0 0.0
        %224 = vmatpush1.msra.mxu0 0.0
        %225 = vmatprep.subr.mxu0 0.0
        %226 = vmatpush1.msra.mxu0 0.0
        %227 = vmatprep.subr.mxu0 0.0
        %228 = vmatpush1.msra.mxu0 0.0
        %229 = vmatprep.subr.mxu0 0.0
        %230 = vmatpush1.msra.mxu0 0.0
        %231 = vmatprep.subr.mxu0 0.0
        %232 = vmatpush1.msra.mxu0 0.0
        %233 = vmatprep.subr.mxu0 0.0
        %234 = vmatpush1.msra.mxu0 0.0
        %235 = vmatprep.subr.mxu0 0.0
        %236 = vmatpush1.msra.mxu0 0.0
        %237 = vmatprep.subr.mxu0 0.0
        %238 = vmatpush1.msra.mxu0 0.0
        %239 = vmatprep.subr.mxu0 0.0
        %240 = vmatpush1.msra.mxu0 0.0
        %241 = vmatprep.subr.mxu0 0.0
        %242 = vmatpush1.msra.mxu0 0.0
        %243 = vmatprep.subr.mxu0 0.0
        %244 = vmatpush1.msra.mxu0 0.0
        %245 = vmatprep.subr.mxu0 0.0
        %246 = vmatpush1.msra.mxu0 0.0
        %247 = vmatprep.subr.mxu0 0.0
        %248 = vmatpush1.msra.mxu0 0.0
        %249 = vmatprep.subr.mxu0 0.0
        %250 = vmatpush1.msra.mxu0 0.0
        %251 = vmatprep.subr.mxu0 0.0
        %252 = vmatpush1.msra.mxu0 0.0
        %253 = vmatprep.subr.mxu0 0.0
        %254 = vmatpush1.msra.mxu0 0.0
        %255 = vmatprep.subr.mxu0 0.0
        %256 = vmatpush1.msra.mxu0 0.0
        %257 = vmatprep.subr.mxu0 0.0
        %258 = vmatpush1.msra.mxu0 0.0
        %259 = vmatprep.subr.mxu0 0.0
        %260 = vmatpush1.msra.mxu0 0.0
        %261 = vmatprep.subr.mxu0 0.0
        %262 = vmatpush1.msra.mxu0 0.0
        %263 = vmatprep.subr.mxu0 0.0
        %264 = vmatpush1.msra.mxu0 0.0
        %265 = vmatprep.subr.mxu0 0.0
        %266 = vmatpush1.msra.mxu0 0.0
        %267 = vmatprep.subr.mxu0 0.0
        %268 = vmatpush1.msra.mxu0 0.0
        %269 = vmatprep.subr.mxu0 0.0
        %270 = vmatpush1.msra.mxu0 0.0
        %271 = vmatprep.mubr.f32.mxu0 0.0
        %272 = vmatmul.mubr.f32.gmra.mrb[0].mxu0 %v202
        %v273 = vpop.f32.mrb[0].mxu0
        %v274 = vadd.f32 %v199, %v273
        %v275 = vpop.f32.mrb[0].mxu0
        %276 = vdwg.mxu0
        %v277 = vsub.f32 0.0, %v274
        %v278 = vmul.f32 %v277, 1.442695
        %v279 = vpow.pop %v278
        %v280 = vadd.f32 %v279, 1.0
        %v281 = vrcp.pop %v280
        %v282 = vmul.f32 1.0, %v281
        %284 = vset.pattern.permute.xlu0 0
        %285 = vperm.xlu0 %284, %v282
        %v286 = vpop.permute.xlu0 %285
        %v288 = vunpack.c.l.s4 839922192
        %v289 = vunpack.c.0.s8 %v288
        %v290 = vlaneseq
        %v291 = vshrl.u32 %v290, 7
        %v292 = vsub.s32 %v289, %v291
        %v293 = vrot.slane %v286, %v292
        %v295 = vmul.f32 %v187, %v293
        %296 = vst [vmem:[%s186] sm:$0xff] %v295
        %s297 = sand.u32 %s96, 1
        %s298 = scalar_lea.sflag [#allocation4], %s297
        %s299 = sand.u32 %s96, 1
        %s300 = smul.addr %s299, 8
        %s301 = scalar_lea.vmem [#allocation5], %s300
        // Predicated region
        $region37: #{tpu_custom_call.1} parent=31 // pred_check
          %p302 = pneg %p106
        $region38: #{tpu_custom_call.1} parent=31 // pred_check_branch
          %304 = sbr.rel (%p302) target = $region40
        $region39: #{tpu_custom_call.1} parent=31 // pred_region
          %s306 = ssub.s32 128, 128
          %307 = vsyncadd %s298, %s306
          %s308 = smul.addr %s20, 2
          %s309 = smul.addr %s308, 64
          %s310 = scalar_lea.hbm %s3, %s309
          %s312 = sshll.u32 %s301, 4
          %s313 = int_to_ptr.vmem [resolvable:$true] %s312
          %315 = dma.vmem_to_hbm [thread:$0]  %s313, 128, %s310, %s298
        $region40: #{tpu_custom_call.1} parent=31 // pred_fallthru
          _
      $region32: #{tpu_custom_call.1} parent=5 // pred_fallthru
        _
      %p316 = scmp.le.s32.totalorder 2, %s15
      // Predicated region
      $region41: #{tpu_custom_call.1} parent=5 // pred_check
        %p317 = pneg %p316
      $region42: #{tpu_custom_call.1} parent=5 // pred_check_branch
        %319 = sbr.rel (%p317) target = $region44
      $region43: #{tpu_custom_call.1} parent=5 // pred_region
        %s320 = ssub.s32 %s15, 2
        // Predicated region
        $region45: #{tpu_custom_call.1} parent=43 // pred_check
          %p321 = pneg %p112
        $region46: #{tpu_custom_call.1} parent=43 // pred_check_branch
          %323 = sbr.rel (%p321) target = $region48
        $region47: #{tpu_custom_call.1} parent=43 // pred_region
          %s324 = sand.u32 %s97, 1
          %s325 = scalar_lea.sflag [#allocation4], %s324
          %s326 = sand.u32 %s97, 1
          %s327 = smul.addr %s326, 8
          %s328 = scalar_lea.vmem [#allocation5], %s327
          %329 = dma.done %s325, 128
        $region48: #{tpu_custom_call.1} parent=43 // pred_fallthru
          _
      $region44: #{tpu_custom_call.1} parent=5 // pred_fallthru
        _
    $region6: #{tpu_custom_call.1} parent=1 // loop_footer
      %s19 = sadd.s32 1, %s15
    $region7: #{tpu_custom_call.1} parent=1 // loop_footer_branch
      %14 = sbr.rel target = $region3
    $region8: #{tpu_custom_call.1} parent=1 // loop_exit
      _
    %330 = vsyncpa [#allocation3], 1
    %s331 = scalar_lea.sflag [#allocation3], 1
    %332 = vsyncpa %s331, 1
    %333 = vsyncpa [#allocation4], 1
    %s334 = scalar_lea.sflag [#allocation4], 1
    %335 = vsyncpa %s334, 1

</llo_original>
